<compile_context>
chip_gen: v7x
topology: tpu7x:2x2x1
jax: 0.10.0
libtpu: 0.0.40
codegen_flags: <defaults>
</compile_context>

<pallas_src>
import math
import numpy as np

import jax
import jax.numpy as jnp
from jax import lax
from jax.experimental import pallas as pl
from jax.experimental.pallas import tpu as pltpu


# ----------------------------- parameter setup (numpy, deterministic) --------

def get_mel_points(fs, n_filt, fmin=80):
    high_freq_mel = 2595 * np.log10(1 + fs / 2 / 700)
    mel_points = np.linspace(fmin, high_freq_mel, n_filt)
    f_cos = 700 * (10 ** (mel_points / 2595) - 1)
    return f_cos


def get_bands(f_cos, fs):
    b1 = np.roll(f_cos, 1)
    b2 = np.roll(f_cos, -1)
    b1[0] = 30
    b2[-1] = fs / 2 - 100
    return (b1, b2)


# ----------------------------- filter bank construction (jnp glue) -----------

def _sinc(band, t_right):
    # band: (n_filt,), t_right: (K,)  ->  (n_filt, 2K+1)
    n_filt = band.shape[0]
    arg = 2.0 * math.pi * band[:, None] * t_right[None, :]
    y_right = jnp.sin(arg) / arg
    y_left = jnp.flip(y_right, axis=1)
    ones = jnp.ones((n_filt, 1), dtype=band.dtype)
    return jnp.concatenate([y_left, ones, y_right], axis=1)


def build_filters(filt_b1, filt_band, hamming_window, t_right, fs,
                  min_freq=50.0, min_band=50.0):
    filt_beg_freq = jnp.abs(filt_b1) + min_freq / fs
    filt_end_freq = filt_beg_freq + (jnp.abs(filt_band) + min_band / fs)
    low_pass1 = 2.0 * filt_beg_freq[:, None] * _sinc(filt_beg_freq * fs, t_right)
    low_pass2 = 2.0 * filt_end_freq[:, None] * _sinc(filt_end_freq * fs, t_right)
    band_pass = low_pass2 - low_pass1
    # NOTE: like the PyTorch original, this divides by a per-filter max that is
    # not guaranteed nonzero/positive for degenerate learned bands; kept as-is
    # to preserve forward semantics.
    max_band = jnp.max(band_pass, axis=1, keepdims=True)
    band_pass = band_pass / max_band
    filters = band_pass * hamming_window[None, :]
    return filters.astype(jnp.float32)


# ----------------------------- Pallas conv1d kernel --------------------------

def sinc_conv_kernel(x0_ref, x1_ref, w_ref, o_ref, p_ref):
    """Per-(batch, L-tile) 1-D convolution (cross-correlation, conv1d semantics).

    x0_ref: (1, 1, TL)   current tile of the padded input
    x1_ref: (1, 1, TL)   next tile of the padded input (halo source)
    w_ref : (NF, KD8)    zero-padded filter bank
    o_ref : (1, NF, TL)  output tile (lane-dense last dim)
    p_ref : (KD8, TL)    VMEM scratch -- im2col patch matrix for this tile
    """
    KD8, TL = p_ref.shape
    G = KD8 // 8                     # tap groups of 8 (static)
    TLW = TL + KD8 - 8               # width of the 8-shifted slab

    # 2*TL window of the padded signal covering this tile plus its halo.
    xw = jnp.concatenate([x0_ref[0], x1_ref[0]], axis=-1)          # (1, 2*TL)

    # 8 consecutively shifted copies of the window, one per sublane.
    # xs8[r, c] = xw[0, c + r]
    xs8 = jnp.concatenate([xw[:, r:r + TLW] for r in range(8)], axis=0)  # (8, TLW)

    # im2col by sublane groups: one full-8-sublane, lane-dense store per group.
    # p_ref[8g + r, t] = xs8[r, 8g + t] = xpad[tile_start + t + (8g + r)]
    for g in range(G):
        p_ref[8 * g:8 * (g + 1), :] = xs8[:, 8 * g:8 * g + TL]

    # out[f, t] = sum_k w[f, k] * xpad[tile_start + t + k]   (MXU, f32 accumulate)
    o_ref[0] = jnp.dot(w_ref[...], p_ref[...],
                       preferred_element_type=jnp.float32).astype(o_ref.dtype)


def _round_up(v, m):
    return (v + m - 1) // m * m


def sinc_conv_pallas(x, filters, *, l_tile=1024):
    """x: (batch, 1, L) float32, filters: (n_filt, filt_dim) float32 (odd filt_dim)."""
    B, C, L = x.shape
    assert C == 1
    n_filt, filt_dim = filters.shape
    assert filt_dim % 2 == 1, "odd filter width required for same-length output"
    assert l_tile % 128 == 0
    pad = (filt_dim - 1) // 2

    # Zero-pad the filter bank: taps -> multiple of 8, filters -> multiple of 8.
    KD8 = _round_up(filt_dim, 8)
    NF = _round_up(n_filt, 8)
    w = jnp.zeros((NF, KD8), jnp.float32).at[:n_filt, :filt_dim].set(filters)

    # Lane-dense L tiles; the halo must fit inside one extra tile (KD8 <= TL).
    TL = max(min(l_tile, _round_up(L, 128)), _round_up(KD8, 128))
    assert KD8 <= TL
    Lp = _round_up(L, TL)
    NT = Lp // TL

    # Single wrapper pad: left halo + right fill so (NT + 1) tiles of TL exist
    # (the "+1" tile is the halo source for the last output tile).
    total = (NT + 1) * TL
    xpad = jnp.pad(x, ((0, 0), (0, 0), (pad, total - L - pad)))

    out = pl.pallas_call(
        sinc_conv_kernel,
        out_shape=jax.ShapeDtypeStruct((B, NF, Lp), jnp.float32),
        grid_spec=pltpu.PrefetchScalarGridSpec(
            num_scalar_prefetch=0,
            grid=(B, NT),
            in_specs=[
                pl.BlockSpec((1, 1, TL), lambda b, j: (b, 0, j)),       # tile j
                pl.BlockSpec((1, 1, TL), lambda b, j: (b, 0, j + 1)),   # tile j+1 (halo)
                pl.BlockSpec((NF, KD8), lambda b, j: (0, 0)),           # filter bank
            ],
            out_specs=pl.BlockSpec((1, NF, TL), lambda b, j: (b, 0, j)),
            scratch_shapes=[pltpu.VMEM((KD8, TL), jnp.float32)],
        ),
        compiler_params=pltpu.CompilerParams(
            dimension_semantics=("parallel", "parallel"),
        ),
    )(xpad, xpad, w)

    if NF != n_filt or Lp != L:
        out = out[:, :n_filt, :L]
    return out


# ----------------------------- full forward ----------------------------------

def sinc_conv_forward(x, filt_b1, filt_band, hamming_window, t_right, fs):
    filters = build_filters(filt_b1, filt_band, hamming_window, t_right, fs)
    return sinc_conv_pallas(x, filters)


# ----------------------------- main -------------------------------------------

if __name__ == "__main__":
    # small shapes consistent with the module's forward: x is (batch, 1, length)
    fs = 16000
    n_filt = 8
    filt_dim = 65           # odd -> output length == input length
    batch = 2
    length = 1000           # not a multiple of 128/TL -> exercises padding + slice

    # deterministic parameters, exactly as SincConv.__init__
    f_cos = get_mel_points(fs, n_filt)
    b1, b2 = get_bands(f_cos, fs)
    filt_b1 = jnp.asarray(b1 / fs, dtype=jnp.float32)
    filt_band = jnp.asarray((b2 - b1) / fs, dtype=jnp.float32)
    hamming_window = jnp.asarray(np.hamming(filt_dim), dtype=jnp.float32)
    K = (filt_dim - 1) // 2
    t_right = jnp.asarray(
        np.linspace(1, (filt_dim - 1) / 2, num=K) / fs, dtype=jnp.float32)

    key = jax.random.PRNGKey(0)
    x = jax.random.normal(key, (batch, 1, length), dtype=jnp.float32)

    fwd = jax.jit(sinc_conv_forward, static_argnums=(5,))
    out = fwd(x, filt_b1, filt_band, hamming_window, t_right, fs)
    out = jax.block_until_ready(out)
    assert out.shape == (batch, n_filt, length)

    # reference check against XLA conv1d (same semantics as F.conv1d)
    filters = build_filters(filt_b1, filt_band, hamming_window, t_right, fs)
    pad = (filt_dim - 1) // 2
    ref = lax.conv_general_dilated(
        x, filters[:, None, :], window_strides=(1,), padding=[(pad, pad)],
        dimension_numbers=("NCH", "OIH", "NCH"),
        precision=lax.Precision.HIGHEST)
    max_err = jnp.max(jnp.abs(out - ref))
    # Tolerance chosen to catch any indexing/halo/tap-alignment bug (those give
    # O(1) errors) while staying robust to MXU f32 matmul pass decomposition.
    assert jnp.allclose(out, ref, atol=2e-2, rtol=2e-2), f"max abs err {max_err}"

    print("KERNEL_OK")
</pallas_src>

<mosaic_0001>
module attributes {stable_mosaic.version = 11 : i64} {
  func.func @sinc_conv_kernel(%arg0: i32, %arg1: i32, %arg2: memref<1x1x1024xf32, #tpu.memory_space<vmem>>, %arg3: memref<1x1x1024xf32, #tpu.memory_space<vmem>>, %arg4: memref<8x72xf32, #tpu.memory_space<vmem>>, %arg5: memref<1x8x1024xf32, #tpu.memory_space<vmem>>, %arg6: memref<72x1024xf32, #tpu.memory_space<vmem>>) attributes {dimension_semantics = [#tpu.dimension_semantics<parallel>, #tpu.dimension_semantics<parallel>], iteration_bounds = array<i64: 2, 1>, scalar_prefetch = 0 : i64, scratch_operands = 1 : i64, tpu.core_type = #tpu.core_type<tc>, window_params = [{transform_indices = @transform_0, window_bounds = array<i64: 1, 1, 1024>}, {transform_indices = @transform_1, window_bounds = array<i64: 1, 1, 1024>}, {pipeline_mode = #tpu.pipeline_mode<synchronous>, transform_indices = @transform_2, window_bounds = array<i64: 8, 72>}, {transform_indices = @transform_3, window_bounds = array<i64: 1, 8, 1024>}]} {
    %c0 = arith.constant 0 : index
    %c0_0 = arith.constant 0 : index
    %c0_1 = arith.constant 0 : index
    %0 = vector.load %arg2[%c0, %c0_0, %c0_1] : memref<1x1x1024xf32, #tpu.memory_space<vmem>>, vector<1x1x1024xf32>
    %1 = vector.shape_cast %0 : vector<1x1x1024xf32> to vector<1x1024xf32>
    %c0_2 = arith.constant 0 : index
    %c0_3 = arith.constant 0 : index
    %c0_4 = arith.constant 0 : index
    %2 = vector.load %arg3[%c0_2, %c0_3, %c0_4] : memref<1x1x1024xf32, #tpu.memory_space<vmem>>, vector<1x1x1024xf32>
    %3 = vector.shape_cast %2 : vector<1x1x1024xf32> to vector<1x1024xf32>
    %4 = tpu.concatenate %1, %3 in 1 : vector<1x1024xf32>, vector<1x1024xf32> -> vector<1x2048xf32>
    %5 = vector.extract_strided_slice %4 {offsets = [0, 0], sizes = [1, 1088], strides = [1, 1]} : vector<1x2048xf32> to vector<1x1088xf32>
    %6 = vector.extract_strided_slice %4 {offsets = [0, 1], sizes = [1, 1088], strides = [1, 1]} : vector<1x2048xf32> to vector<1x1088xf32>
    %7 = vector.extract_strided_slice %4 {offsets = [0, 2], sizes = [1, 1088], strides = [1, 1]} : vector<1x2048xf32> to vector<1x1088xf32>
    %8 = vector.extract_strided_slice %4 {offsets = [0, 3], sizes = [1, 1088], strides = [1, 1]} : vector<1x2048xf32> to vector<1x1088xf32>
    %9 = vector.extract_strided_slice %4 {offsets = [0, 4], sizes = [1, 1088], strides = [1, 1]} : vector<1x2048xf32> to vector<1x1088xf32>
    %10 = vector.extract_strided_slice %4 {offsets = [0, 5], sizes = [1, 1088], strides = [1, 1]} : vector<1x2048xf32> to vector<1x1088xf32>
    %11 = vector.extract_strided_slice %4 {offsets = [0, 6], sizes = [1, 1088], strides = [1, 1]} : vector<1x2048xf32> to vector<1x1088xf32>
    %12 = vector.extract_strided_slice %4 {offsets = [0, 7], sizes = [1, 1088], strides = [1, 1]} : vector<1x2048xf32> to vector<1x1088xf32>
    %13 = tpu.concatenate %5, %6, %7, %8, %9, %10, %11, %12 in 0 : vector<1x1088xf32>, vector<1x1088xf32>, vector<1x1088xf32>, vector<1x1088xf32>, vector<1x1088xf32>, vector<1x1088xf32>, vector<1x1088xf32>, vector<1x1088xf32> -> vector<8x1088xf32>
    %14 = vector.extract_strided_slice %13 {offsets = [0, 0], sizes = [8, 1024], strides = [1, 1]} : vector<8x1088xf32> to vector<8x1024xf32>
    %c0_5 = arith.constant 0 : index
    %c0_6 = arith.constant 0 : index
    %15 = vector.load %arg6[%c0_5, %c0_6] : memref<72x1024xf32, #tpu.memory_space<vmem>>, vector<8x1024xf32>
    tpu.vector_store %arg6[%c0_5, %c0_6], %14 {strides = array<i32>} : memref<72x1024xf32, #tpu.memory_space<vmem>>, vector<8x1024xf32>,
    %16 = vector.extract_strided_slice %13 {offsets = [0, 8], sizes = [8, 1024], strides = [1, 1]} : vector<8x1088xf32> to vector<8x1024xf32>
    %c8 = arith.constant 8 : index
    %c0_7 = arith.constant 0 : index
    %17 = vector.load %arg6[%c8, %c0_7] : memref<72x1024xf32, #tpu.memory_space<vmem>>, vector<8x1024xf32>
    tpu.vector_store %arg6[%c8, %c0_7], %16 {strides = array<i32>} : memref<72x1024xf32, #tpu.memory_space<vmem>>, vector<8x1024xf32>,
    %18 = vector.extract_strided_slice %13 {offsets = [0, 16], sizes = [8, 1024], strides = [1, 1]} : vector<8x1088xf32> to vector<8x1024xf32>
    %c16 = arith.constant 16 : index
    %c0_8 = arith.constant 0 : index
    %19 = vector.load %arg6[%c16, %c0_8] : memref<72x1024xf32, #tpu.memory_space<vmem>>, vector<8x1024xf32>
    tpu.vector_store %arg6[%c16, %c0_8], %18 {strides = array<i32>} : memref<72x1024xf32, #tpu.memory_space<vmem>>, vector<8x1024xf32>,
    %20 = vector.extract_strided_slice %13 {offsets = [0, 24], sizes = [8, 1024], strides = [1, 1]} : vector<8x1088xf32> to vector<8x1024xf32>
    %c24 = arith.constant 24 : index
    %c0_9 = arith.constant 0 : index
    %21 = vector.load %arg6[%c24, %c0_9] : memref<72x1024xf32, #tpu.memory_space<vmem>>, vector<8x1024xf32>
    tpu.vector_store %arg6[%c24, %c0_9], %20 {strides = array<i32>} : memref<72x1024xf32, #tpu.memory_space<vmem>>, vector<8x1024xf32>,
    %22 = vector.extract_strided_slice %13 {offsets = [0, 32], sizes = [8, 1024], strides = [1, 1]} : vector<8x1088xf32> to vector<8x1024xf32>
    %c32 = arith.constant 32 : index
    %c0_10 = arith.constant 0 : index
    %23 = vector.load %arg6[%c32, %c0_10] : memref<72x1024xf32, #tpu.memory_space<vmem>>, vector<8x1024xf32>
    tpu.vector_store %arg6[%c32, %c0_10], %22 {strides = array<i32>} : memref<72x1024xf32, #tpu.memory_space<vmem>>, vector<8x1024xf32>,
    %24 = vector.extract_strided_slice %13 {offsets = [0, 40], sizes = [8, 1024], strides = [1, 1]} : vector<8x1088xf32> to vector<8x1024xf32>
    %c40 = arith.constant 40 : index
    %c0_11 = arith.constant 0 : index
    %25 = vector.load %arg6[%c40, %c0_11] : memref<72x1024xf32, #tpu.memory_space<vmem>>, vector<8x1024xf32>
    tpu.vector_store %arg6[%c40, %c0_11], %24 {strides = array<i32>} : memref<72x1024xf32, #tpu.memory_space<vmem>>, vector<8x1024xf32>,
    %26 = vector.extract_strided_slice %13 {offsets = [0, 48], sizes = [8, 1024], strides = [1, 1]} : vector<8x1088xf32> to vector<8x1024xf32>
    %c48 = arith.constant 48 : index
    %c0_12 = arith.constant 0 : index
    %27 = vector.load %arg6[%c48, %c0_12] : memref<72x1024xf32, #tpu.memory_space<vmem>>, vector<8x1024xf32>
    tpu.vector_store %arg6[%c48, %c0_12], %26 {strides = array<i32>} : memref<72x1024xf32, #tpu.memory_space<vmem>>, vector<8x1024xf32>,
    %28 = vector.extract_strided_slice %13 {offsets = [0, 56], sizes = [8, 1024], strides = [1, 1]} : vector<8x1088xf32> to vector<8x1024xf32>
    %c56 = arith.constant 56 : index
    %c0_13 = arith.constant 0 : index
    %29 = vector.load %arg6[%c56, %c0_13] : memref<72x1024xf32, #tpu.memory_space<vmem>>, vector<8x1024xf32>
    tpu.vector_store %arg6[%c56, %c0_13], %28 {strides = array<i32>} : memref<72x1024xf32, #tpu.memory_space<vmem>>, vector<8x1024xf32>,
    %30 = vector.extract_strided_slice %13 {offsets = [0, 64], sizes = [8, 1024], strides = [1, 1]} : vector<8x1088xf32> to vector<8x1024xf32>
    %c64 = arith.constant 64 : index
    %c0_14 = arith.constant 0 : index
    %31 = vector.load %arg6[%c64, %c0_14] : memref<72x1024xf32, #tpu.memory_space<vmem>>, vector<8x1024xf32>
    tpu.vector_store %arg6[%c64, %c0_14], %30 {strides = array<i32>} : memref<72x1024xf32, #tpu.memory_space<vmem>>, vector<8x1024xf32>,
    %c0_15 = arith.constant 0 : index
    %c0_16 = arith.constant 0 : index
    %32 = vector.load %arg4[%c0_15, %c0_16] : memref<8x72xf32, #tpu.memory_space<vmem>>, vector<8x72xf32>
    %c0_17 = arith.constant 0 : index
    %c0_18 = arith.constant 0 : index
    %33 = vector.load %arg6[%c0_17, %c0_18] : memref<72x1024xf32, #tpu.memory_space<vmem>>, vector<72x1024xf32>
    %cst = arith.constant dense<0.000000e+00> : vector<8x1024xf32>
    %34 = tpu.matmul %32, %33, %cst {dimension_numbers = #tpu.dot_dimension_numbers<[1], [0], [0], [1], [0, 0, 1, 1], [], []>} : vector<8x72xf32>, vector<72x1024xf32>, vector<8x1024xf32> -> vector<8x1024xf32>
    %c0_19 = arith.constant 0 : index
    %c0_20 = arith.constant 0 : index
    %c0_21 = arith.constant 0 : index
    %35 = vector.load %arg5[%c0_19, %c0_20, %c0_21] : memref<1x8x1024xf32, #tpu.memory_space<vmem>>, vector<1x8x1024xf32>
    %36 = vector.shape_cast %35 : vector<1x8x1024xf32> to vector<8x1024xf32>
    %37 = vector.shape_cast %34 : vector<8x1024xf32> to vector<1x8x1024xf32>
    tpu.vector_store %arg5[%c0_19, %c0_20, %c0_21], %37 {strides = array<i32>} : memref<1x8x1024xf32, #tpu.memory_space<vmem>>, vector<1x8x1024xf32>,
    return
  }
  func.func @transform_0(%arg0: i32, %arg1: i32) -> (i32, i32, i32) {
    %c0_i32 = arith.constant 0 : i32
    %c0_i32_0 = arith.constant 0 : i32
    return %arg0, %c0_i32, %arg1 : i32, i32, i32
  }
  func.func @transform_1(%arg0: i32, %arg1: i32) -> (i32, i32, i32) {
    %c1_i32 = arith.constant 1 : i32
    %0 = arith.addi %arg1, %c1_i32 : i32
    %c0_i32 = arith.constant 0 : i32
    %c0_i32_0 = arith.constant 0 : i32
    return %arg0, %c0_i32, %0 : i32, i32, i32
  }
  func.func @transform_2(%arg0: i32, %arg1: i32) -> (i32, i32) {
    %c0_i32 = arith.constant 0 : i32
    %c0_i32_0 = arith.constant 0 : i32
    %c0_i32_1 = arith.constant 0 : i32
    return %c0_i32, %c0_i32_0 : i32, i32
  }
  func.func @transform_3(%arg0: i32, %arg1: i32) -> (i32, i32, i32) {
    %c0_i32 = arith.constant 0 : i32
    %c0_i32_0 = arith.constant 0 : i32
    return %arg0, %c0_i32, %arg1 : i32, i32, i32
  }
}

</mosaic_0001>

<llo_original>
// kernel: sinc_conv_forward.1
$region0: #{sinc_conv_forward.1}
  #allocation0 [shape = 'u32[]', space=smem, size = 0x4, offset = 0x4, fixed_abs, tag = 'smem constant byte address 0x4 - core index']
  #allocation1 [shape = 'u32[144,128]{1,0:T(1,128)}', space=vmem, size = 0x12000, scoped, tag = 'internal scratch']
  #allocation2 [shape = 'f32[72,1024]{1,0:T(8,128)}', space=vmem, size = 0x48000, scoped, tag = 'scratch operand']
  %s0 = inlined_call_operand.vmem [shape: f32[2,1,2048], index: 0, kind: input, shape index: {}, may-alias: {0,1}]
  %s1 = inlined_call_operand.vmem [shape: f32[2,1,2048], index: 1, kind: input, shape index: {}, may-alias: {0,1}]
  %s2 = inlined_call_operand.vmem [shape: f32[8,72], index: 2, kind: input, shape index: {}]
  %s3 = inlined_call_operand.hbm [shape: f32[2,8,1024], index: 3, kind: output, shape index: {}]
  %s4 = sld [smem:[#allocation0]]
  $region45: #{sinc_conv_forward.1} parent=0
    _
  %s6 = ssub.s32 1, %s4
  %s7 = scalar_select 0, %s6, %s4
  $region1: #{sinc_conv_forward.1} parent=0
    #allocation3 [shape = 'u8[65536]{0}', space=vmem, size = 0x10000, scoped, tag = 'output window, operand 0']
    #allocation4 [shape = 's32[2]{0}', space=sflag, size = 0x8, scoped, tag = 'scoped memory for sinc_conv_forward.1']
    %8 = vsyncpa [#allocation4], 0
    %s9 = scalar_lea.sflag [#allocation4], 1
    %10 = vsyncpa %s9, 0
    loop: start=0, step=1, limit=4
    $region2: #{sinc_conv_forward.1} parent=1 // loop_pre_header
      _
    $region3: #{sinc_conv_forward.1} parent=1 // loop_header
      %s12 = sphi 0, %s16
      %p13 = scmp.ge.s32.totalorder %s12, 4
      %s19 = sphi 0, %s31
      %s20 = sphi 0, %s27
      %s21 = sphi 0, %s19
      %s22 = sphi 0, %s20
      %s23 = sphi 0, %s21
      %s24 = sphi 0, %s22
      %s36 = sphi 0, %s38
      %s39 = sphi 0, %s36
      %s40 = sphi 0, %s39
      %s56 = sphi 0, %s40
      %s66 = sphi 0, %s68
      %s69 = sphi 0, %s66
      %s70 = sphi 0, %s69
      %s86 = sphi 0, %s70
      %s90 = sphi 0, %s90
      %s92 = sphi 0, %s90
      %s93 = sphi 0, %s92
      %s107 = sphi 0, %s93
      %s115 = sphi 0, %s117
      %s118 = sphi 0, %s115
      %s119 = sphi 0, %s118
      %s135 = sphi 0, %s119
    $region4: #{sinc_conv_forward.1} parent=1 // loop_header_branch
      %15 = sbr.rel (%p13) target = $region8
    $region5: #{sinc_conv_forward.1} parent=1 // loop_body
      %s17 = ssub.s32 %s12, 1
      %s18 = ssub.s32 %s12, 2
      %s25 = sadd.s32 1, %s20
      %p26 = scmp.ge.s32.totalorder %s25, 1
      %s27 = scalar_select %p26, 0, %s25
      %s28 = sadd.s32 1, %s19
      %s29 = scalar_select %p26, %s28, %s19
      %p30 = scmp.ge.s32.totalorder %s29, 2
      %s31 = scalar_select %p30, 0, %s29
      %s32 = ssub.s32 %s19, %s31
      %s33 = ssub.s32 %s20, %s27
      %s34 = sor.u32 %s32, %s33
      %p35 = scmp.eq.s32.totalorder %s34, 0
      %s37 = sadd.s32 %s36, 1
      %s38 = scalar_select %p35, %s36, %s37
      %p41 = pneg %p35
      %p42 = scmp.eq.s32.totalorder %s12, 1
      %p43 = por %p41, %p42
      %p44 = scmp.ne.s32.totalorder %s36, %s39
      %p45 = scmp.eq.s32.totalorder %s12, 0
      %p46 = por %p44, %p45
      %p47 = scmp.ne.s32.totalorder %s36, %s39
      %p48 = scmp.eq.s32.totalorder %s17, 1
      %p49 = por %p47, %p48
      %p50 = scmp.ne.s32.totalorder %s39, %s40
      %p51 = scmp.eq.s32.totalorder %s17, 0
      %p52 = por %p50, %p51
      %p53 = scmp.ne.s32.totalorder %s39, %s40
      %p54 = scmp.eq.s32.totalorder %s18, 1
      %p55 = por %p53, %p54
      %p57 = scmp.ne.s32.totalorder %s40, %s56
      %p58 = scmp.eq.s32.totalorder %s18, 0
      %p59 = por %p57, %p58
      %s60 = sadd.s32 %s20, 1
      %s61 = sadd.s32 %s27, 1
      %s62 = ssub.s32 %s19, %s31
      %s63 = ssub.s32 %s60, %s61
      %s64 = sor.u32 %s62, %s63
      %p65 = scmp.eq.s32.totalorder %s64, 0
      %s67 = sadd.s32 %s66, 1
      %s68 = scalar_select %p65, %s66, %s67
      %p71 = pneg %p65
      %p72 = scmp.eq.s32.totalorder %s12, 1
      %p73 = por %p71, %p72
      %p74 = scmp.ne.s32.totalorder %s66, %s69
      %p75 = scmp.eq.s32.totalorder %s12, 0
      %p76 = por %p74, %p75
      %p77 = scmp.ne.s32.totalorder %s66, %s69
      %p78 = scmp.eq.s32.totalorder %s17, 1
      %p79 = por %p77, %p78
      %p80 = scmp.ne.s32.totalorder %s69, %s70
      %p81 = scmp.eq.s32.totalorder %s17, 0
      %p82 = por %p80, %p81
      %p83 = scmp.ne.s32.totalorder %s69, %s70
      %p84 = scmp.eq.s32.totalorder %s18, 1
      %p85 = por %p83, %p84
      %p87 = scmp.ne.s32.totalorder %s70, %s86
      %p88 = scmp.eq.s32.totalorder %s18, 0
      %p89 = por %p87, %p88
      %s91 = sadd.s32 %s90, 1
      %p94 = scmp.eq.s32.totalorder %s12, 1
      %p95 = scmp.ne.s32.totalorder %s90, %s92
      %p96 = scmp.eq.s32.totalorder %s12, 0
      %p97 = por %p95, %p96
      %p98 = scmp.ne.s32.totalorder %s90, %s92
      %p99 = scmp.eq.s32.totalorder %s17, 1
      %p100 = por %p98, %p99
      %p101 = scmp.ne.s32.totalorder %s92, %s93
      %p102 = scmp.eq.s32.totalorder %s17, 0
      %p103 = por %p101, %p102
      %p104 = scmp.ne.s32.totalorder %s92, %s93
      %p105 = scmp.eq.s32.totalorder %s18, 1
      %p106 = por %p104, %p105
      %p108 = scmp.ne.s32.totalorder %s93, %s107
      %p109 = scmp.eq.s32.totalorder %s18, 0
      %p110 = por %p108, %p109
      %s111 = ssub.s32 %s19, %s31
      %s112 = ssub.s32 %s20, %s27
      %s113 = sor.u32 %s111, %s112
      %p114 = scmp.eq.s32.totalorder %s113, 0
      %s116 = sadd.s32 %s115, 1
      %s117 = scalar_select %p114, %s115, %s116
      %p120 = pneg %p114
      %p121 = scmp.eq.s32.totalorder %s12, 1
      %p122 = por %p120, %p121
      %p123 = scmp.ne.s32.totalorder %s115, %s118
      %p124 = scmp.eq.s32.totalorder %s12, 0
      %p125 = por %p123, %p124
      %p126 = scmp.ne.s32.totalorder %s115, %s118
      %p127 = scmp.eq.s32.totalorder %s17, 1
      %p128 = por %p126, %p127
      %p129 = scmp.ne.s32.totalorder %s118, %s119
      %p130 = scmp.eq.s32.totalorder %s17, 0
      %p131 = por %p129, %p130
      %p132 = scmp.ne.s32.totalorder %s118, %s119
      %p133 = scmp.eq.s32.totalorder %s18, 1
      %p134 = por %p132, %p133
      %p136 = scmp.ne.s32.totalorder %s119, %s135
      %p137 = scmp.eq.s32.totalorder %s18, 0
      %p138 = por %p136, %p137
      %p139 = scmp.le.s32.totalorder 1, %s12
      %p140 = scmp.lt.s32.totalorder %s12, 3
      %p141 = pnand %p139, %p140
      %p142 = pneg %p141
      // Predicated region
      $region9: #{sinc_conv_forward.1} parent=5 // pred_check
        _
      $region10: #{sinc_conv_forward.1} parent=5 // pred_check_branch
        %144 = sbr.rel (%p141) target = $region12
      $region11: #{sinc_conv_forward.1} parent=5 // pred_region
        %s145 = ssub.s32 %s12, 1
        // Predicated region
        $region13: #{sinc_conv_forward.1} parent=11 // pred_check
          %p146 = pneg %p103
        $region14: #{sinc_conv_forward.1} parent=11 // pred_check_branch
          %148 = sbr.rel (%p146) target = $region16
        $region15: #{sinc_conv_forward.1} parent=11 // pred_region
          _
        $region16: #{sinc_conv_forward.1} parent=11 // pred_fallthru
          _
      $region12: #{sinc_conv_forward.1} parent=5 // pred_fallthru
        _
      %p149 = scmp.lt.s32.totalorder %s12, 2
      // Predicated region
      $region17: #{sinc_conv_forward.1} parent=5 // pred_check
        %p150 = pneg %p149
      $region18: #{sinc_conv_forward.1} parent=5 // pred_check_branch
        %152 = sbr.rel (%p150) target = $region20
      $region19: #{sinc_conv_forward.1} parent=5 // pred_region
        // Predicated region
        $region21: #{sinc_conv_forward.1} parent=19 // pred_check
          %p153 = pneg %p46
        $region22: #{sinc_conv_forward.1} parent=19 // pred_check_branch
          %155 = sbr.rel (%p153) target = $region24
        $region23: #{sinc_conv_forward.1} parent=19 // pred_region
          %s156 = smul.u32 8, %s20
          %p157 = scmp.lt.s32.totalorder %s19, 1
          %s158 = scalar_select %p157, %s19, 1
          %p159 = scmp.lt.s32.totalorder %s156, 15
          %s160 = scalar_select %p159, %s156, 15
          %s161 = smul.addr %s158, 16
          %s162 = sadd.s32 %s160, %s161
          %s163 = scalar_lea.vmem %s0, %s162
          %s164 = smul.u32 8, %s20
        $region24: #{sinc_conv_forward.1} parent=19 // pred_fallthru
          _
        // Predicated region
        $region25: #{sinc_conv_forward.1} parent=19 // pred_check
          %p165 = pneg %p76
        $region26: #{sinc_conv_forward.1} parent=19 // pred_check_branch
          %167 = sbr.rel (%p165) target = $region28
        $region27: #{sinc_conv_forward.1} parent=19 // pred_region
          %s168 = sadd.s32 %s20, 1
          %s169 = smul.u32 8, %s168
          %p170 = scmp.lt.s32.totalorder %s19, 1
          %s171 = scalar_select %p170, %s19, 1
          %p172 = scmp.lt.s32.totalorder %s169, 15
          %s173 = scalar_select %p172, %s169, 15
          %s174 = smul.addr %s171, 16
          %s175 = sadd.s32 %s173, %s174
          %s176 = scalar_lea.vmem %s1, %s175
          %s177 = sadd.s32 %s20, 1
          %s178 = smul.u32 8, %s177
        $region28: #{sinc_conv_forward.1} parent=19 // pred_fallthru
          _
      $region20: #{sinc_conv_forward.1} parent=5 // pred_fallthru
        _
      %p179 = scmp.le.s32.totalorder 1, %s12
      %p180 = scmp.lt.s32.totalorder %s12, 3
      %p181 = pnand %p179, %p180
      %p182 = pneg %p181
      // Predicated region
      $region29: #{sinc_conv_forward.1} parent=5 // pred_check
        _
      $region30: #{sinc_conv_forward.1} parent=5 // pred_check_branch
        %184 = sbr.rel (%p181) target = $region32
      $region31: #{sinc_conv_forward.1} parent=5 // pred_region
        %s185 = ssub.s32 %s12, 1
        %s186 = smul.u32 8, %s22
        %p187 = scmp.lt.s32.totalorder %s21, 1
        %s188 = scalar_select %p187, %s21, 1
        %p189 = scmp.lt.s32.totalorder %s186, 15
        %s190 = scalar_select %p189, %s186, 15
        %s191 = smul.addr %s188, 16
        %s192 = sadd.s32 %s190, %s191
        %s193 = scalar_lea.vmem %s0, %s192
        %p194 = pneg %p52
        %p195 = pneg %p49
        %s196 = sadd.s32 %s22, 1
        %s197 = smul.u32 8, %s196
        %p198 = scmp.lt.s32.totalorder %s21, 1
        %s199 = scalar_select %p198, %s21, 1
        %p200 = scmp.lt.s32.totalorder %s197, 15
        %s201 = scalar_select %p200, %s197, 15
        %s202 = smul.addr %s199, 16
        %s203 = sadd.s32 %s201, %s202
        %s204 = scalar_lea.vmem %s1, %s203
        %p205 = pneg %p82
        %p206 = pneg %p79
        %p207 = pneg %p103
        %p208 = pneg %p100
        %p209 = pneg %p131
        %p210 = pneg %p128
        %s211 = sand.u32 %s118, 1
        %s212 = scalar_lea.sflag [#allocation4], %s211
        %s213 = sand.u32 %s118, 1
        %s214 = smul.addr %s213, 64
        %s215 = scalar_lea.vmem [#allocation3], %s214
        %s216 = smul.u32 8, %s22
        %p217 = scmp.lt.s32.totalorder %s21, 1
        %s218 = scalar_select %p217, %s21, 1
        %p219 = scmp.lt.s32.totalorder %s216, 15
        %s220 = scalar_select %p219, %s216, 15
        %s221 = smul.addr %s218, 16
        %s222 = sadd.s32 %s220, %s221
        %s223 = scalar_lea.vmem %s0, %s222
        %s224 = smul.u32 8, %s22
        %s225 = sadd.s32 %s22, 1
        %s226 = smul.u32 8, %s225
        %p227 = scmp.lt.s32.totalorder %s21, 1
        %s228 = scalar_select %p227, %s21, 1
        %p229 = scmp.lt.s32.totalorder %s226, 15
        %s230 = scalar_select %p229, %s226, 15
        %s231 = smul.addr %s228, 16
        %s232 = sadd.s32 %s230, %s231
        %s233 = scalar_lea.vmem %s1, %s232
        %s234 = sadd.s32 %s22, 1
        %s235 = smul.u32 8, %s234
        %s236 = smul.u32 8, %s22
        %v237 = vld [vmem:[%s223] sm:$0xff]
        %v238 = vld [vmem:[%s233] sm:$0xff]
        %v240 = vlaneseq
        %v241 = vshrl.u32 %v240, 7
        %v242 = vsub.s32 0, %v241
        %v243 = vrot.slane %v237, %v242
        %v244 = vlaneseq
        %v245 = vshrl.u32 %v244, 7
        %v246 = vsub.s32 1, %v245
        %v247 = vrot.slane %v237, %v246
        %v248 = vlaneseq
        %v249 = vshrl.u32 %v248, 7
        %v250 = vsub.s32 2, %v249
        %v251 = vrot.slane %v237, %v250
        %v252 = vlaneseq
        %v253 = vshrl.u32 %v252, 7
        %v254 = vsub.s32 3, %v253
        %v255 = vrot.slane %v237, %v254
        %v256 = vlaneseq
        %v257 = vshrl.u32 %v256, 7
        %v258 = vsub.s32 4, %v257
        %v259 = vrot.slane %v237, %v258
        %v260 = vlaneseq
        %v261 = vshrl.u32 %v260, 7
        %v262 = vsub.s32 5, %v261
        %v263 = vrot.slane %v237, %v262
        %v264 = vlaneseq
        %v265 = vshrl.u32 %v264, 7
        %v266 = vsub.s32 6, %v265
        %v267 = vrot.slane %v237, %v266
        %v268 = vlaneseq
        %v269 = vshrl.u32 %v268, 7
        %v270 = vsub.s32 7, %v269
        %v271 = vrot.slane %v237, %v270
        %v281 = vlaneseq
        %v282 = vshrl.u32 %v281, 7
        %v283 = vsub.s32 0, %v282
        %v284 = vrot.slane %v238, %v283
        %v286 = vrot.slane %v243, 7
        %v287 = vrot.slane %v247, 7
        %v288 = vrot.slane %v251, 7
        %v289 = vrot.slane %v255, 7
        %v290 = vrot.slane %v259, 7
        %v291 = vrot.slane %v263, 7
        %v292 = vrot.slane %v267, 7
        %v293 = vrot.slane %v271, 7
        %v294 = vrot.slane %v284, 7
        %295 = vrot.lane.b32.xlu0 %v286, 127
        %v296 = vpop.permute.xlu0 %295
        %297 = vrot.lane.b32.xlu0 %v287, 127
        %v298 = vpop.permute.xlu0 %297
        %299 = vrot.lane.b32.xlu0 %v288, 127
        %v300 = vpop.permute.xlu0 %299
        %301 = vrot.lane.b32.xlu0 %v289, 127
        %v302 = vpop.permute.xlu0 %301
        %303 = vrot.lane.b32.xlu0 %v290, 127
        %v304 = vpop.permute.xlu0 %303
        %305 = vrot.lane.b32.xlu0 %v291, 127
        %v306 = vpop.permute.xlu0 %305
        %307 = vrot.lane.b32.xlu0 %v292, 127
        %v308 = vpop.permute.xlu0 %307
        %309 = vrot.lane.b32.xlu0 %v293, 127
        %v310 = vpop.permute.xlu0 %309
        %311 = vrot.lane.b32.xlu0 %v294, 127
        %v312 = vpop.permute.xlu0 %311
        %vm313 = vcmask 1039360
        %v314 = vsel %vm313, %v296, %v298
        %v315 = vsel %vm313, %v298, %v300
        %v316 = vsel %vm313, %v300, %v302
        %v317 = vsel %vm313, %v302, %v304
        %v318 = vsel %vm313, %v304, %v306
        %v319 = vsel %vm313, %v306, %v308
        %v320 = vsel %vm313, %v308, %v310
        %v321 = vsel %vm313, %v310, %v312
        %v331 = vrot.slane %v243, 6
        %v332 = vrot.slane %v247, 6
        %v333 = vrot.slane %v251, 6
        %v334 = vrot.slane %v255, 6
        %v335 = vrot.slane %v259, 6
        %v336 = vrot.slane %v263, 6
        %v337 = vrot.slane %v267, 6
        %v338 = vrot.slane %v271, 6
        %v339 = vrot.slane %v284, 6
        %340 = vrot.lane.b32.xlu0 %v331, 126
        %v341 = vpop.permute.xlu0 %340
        %342 = vrot.lane.b32.xlu0 %v332, 126
        %v343 = vpop.permute.xlu0 %342
        %344 = vrot.lane.b32.xlu0 %v333, 126
        %v345 = vpop.permute.xlu0 %344
        %346 = vrot.lane.b32.xlu0 %v334, 126
        %v347 = vpop.permute.xlu0 %346
        %348 = vrot.lane.b32.xlu0 %v335, 126
        %v349 = vpop.permute.xlu0 %348
        %350 = vrot.lane.b32.xlu0 %v336, 126
        %v351 = vpop.permute.xlu0 %350
        %352 = vrot.lane.b32.xlu0 %v337, 126
        %v353 = vpop.permute.xlu0 %352
        %354 = vrot.lane.b32.xlu0 %v338, 126
        %v355 = vpop.permute.xlu0 %354
        %356 = vrot.lane.b32.xlu0 %v339, 126
        %v357 = vpop.permute.xlu0 %356
        %vm358 = vcmask 1031168
        %v359 = vsel %vm358, %v341, %v343
        %v360 = vsel %vm358, %v343, %v345
        %v361 = vsel %vm358, %v345, %v347
        %v362 = vsel %vm358, %v347, %v349
        %v363 = vsel %vm358, %v349, %v351
        %v364 = vsel %vm358, %v351, %v353
        %v365 = vsel %vm358, %v353, %v355
        %v366 = vsel %vm358, %v355, %v357
        %v376 = vrot.slane %v243, 5
        %v377 = vrot.slane %v247, 5
        %v378 = vrot.slane %v251, 5
        %v379 = vrot.slane %v255, 5
        %v380 = vrot.slane %v259, 5
        %v381 = vrot.slane %v263, 5
        %v382 = vrot.slane %v267, 5
        %v383 = vrot.slane %v271, 5
        %v384 = vrot.slane %v284, 5
        %385 = vrot.lane.b32.xlu0 %v376, 125
        %v386 = vpop.permute.xlu0 %385
        %387 = vrot.lane.b32.xlu0 %v377, 125
        %v388 = vpop.permute.xlu0 %387
        %389 = vrot.lane.b32.xlu0 %v378, 125
        %v390 = vpop.permute.xlu0 %389
        %391 = vrot.lane.b32.xlu0 %v379, 125
        %v392 = vpop.permute.xlu0 %391
        %393 = vrot.lane.b32.xlu0 %v380, 125
        %v394 = vpop.permute.xlu0 %393
        %395 = vrot.lane.b32.xlu0 %v381, 125
        %v396 = vpop.permute.xlu0 %395
        %397 = vrot.lane.b32.xlu0 %v382, 125
        %v398 = vpop.permute.xlu0 %397
        %399 = vrot.lane.b32.xlu0 %v383, 125
        %v400 = vpop.permute.xlu0 %399
        %401 = vrot.lane.b32.xlu0 %v384, 125
        %v402 = vpop.permute.xlu0 %401
        %vm403 = vcmask 1022976
        %v404 = vsel %vm403, %v386, %v388
        %v405 = vsel %vm403, %v388, %v390
        %v406 = vsel %vm403, %v390, %v392
        %v407 = vsel %vm403, %v392, %v394
        %v408 = vsel %vm403, %v394, %v396
        %v409 = vsel %vm403, %v396, %v398
        %v410 = vsel %vm403, %v398, %v400
        %v411 = vsel %vm403, %v400, %v402
        %v421 = vrot.slane %v243, 4
        %v422 = vrot.slane %v247, 4
        %v423 = vrot.slane %v251, 4
        %v424 = vrot.slane %v255, 4
        %v425 = vrot.slane %v259, 4
        %v426 = vrot.slane %v263, 4
        %v427 = vrot.slane %v267, 4
        %v428 = vrot.slane %v271, 4
        %v429 = vrot.slane %v284, 4
        %430 = vrot.lane.b32.xlu0 %v421, 124
        %v431 = vpop.permute.xlu0 %430
        %432 = vrot.lane.b32.xlu0 %v422, 124
        %v433 = vpop.permute.xlu0 %432
        %434 = vrot.lane.b32.xlu0 %v423, 124
        %v435 = vpop.permute.xlu0 %434
        %436 = vrot.lane.b32.xlu0 %v424, 124
        %v437 = vpop.permute.xlu0 %436
        %438 = vrot.lane.b32.xlu0 %v425, 124
        %v439 = vpop.permute.xlu0 %438
        %440 = vrot.lane.b32.xlu0 %v426, 124
        %v441 = vpop.permute.xlu0 %440
        %442 = vrot.lane.b32.xlu0 %v427, 124
        %v443 = vpop.permute.xlu0 %442
        %444 = vrot.lane.b32.xlu0 %v428, 124
        %v445 = vpop.permute.xlu0 %444
        %446 = vrot.lane.b32.xlu0 %v429, 124
        %v447 = vpop.permute.xlu0 %446
        %vm448 = vcmask 1014784
        %v449 = vsel %vm448, %v431, %v433
        %v450 = vsel %vm448, %v433, %v435
        %v451 = vsel %vm448, %v435, %v437
        %v452 = vsel %vm448, %v437, %v439
        %v453 = vsel %vm448, %v439, %v441
        %v454 = vsel %vm448, %v441, %v443
        %v455 = vsel %vm448, %v443, %v445
        %v456 = vsel %vm448, %v445, %v447
        %v466 = vrot.slane %v243, 3
        %v467 = vrot.slane %v247, 3
        %v468 = vrot.slane %v251, 3
        %v469 = vrot.slane %v255, 3
        %v470 = vrot.slane %v259, 3
        %v471 = vrot.slane %v263, 3
        %v472 = vrot.slane %v267, 3
        %v473 = vrot.slane %v271, 3
        %v474 = vrot.slane %v284, 3
        %475 = vrot.lane.b32.xlu0 %v466, 123
        %v476 = vpop.permute.xlu0 %475
        %477 = vrot.lane.b32.xlu0 %v467, 123
        %v478 = vpop.permute.xlu0 %477
        %479 = vrot.lane.b32.xlu0 %v468, 123
        %v480 = vpop.permute.xlu0 %479
        %481 = vrot.lane.b32.xlu0 %v469, 123
        %v482 = vpop.permute.xlu0 %481
        %483 = vrot.lane.b32.xlu0 %v470, 123
        %v484 = vpop.permute.xlu0 %483
        %485 = vrot.lane.b32.xlu0 %v471, 123
        %v486 = vpop.permute.xlu0 %485
        %487 = vrot.lane.b32.xlu0 %v472, 123
        %v488 = vpop.permute.xlu0 %487
        %489 = vrot.lane.b32.xlu0 %v473, 123
        %v490 = vpop.permute.xlu0 %489
        %491 = vrot.lane.b32.xlu0 %v474, 123
        %v492 = vpop.permute.xlu0 %491
        %vm493 = vcmask 1006592
        %v494 = vsel %vm493, %v476, %v478
        %v495 = vsel %vm493, %v478, %v480
        %v496 = vsel %vm493, %v480, %v482
        %v497 = vsel %vm493, %v482, %v484
        %v498 = vsel %vm493, %v484, %v486
        %v499 = vsel %vm493, %v486, %v488
        %v500 = vsel %vm493, %v488, %v490
        %v501 = vsel %vm493, %v490, %v492
        %v511 = vrot.slane %v243, 2
        %v512 = vrot.slane %v247, 2
        %v513 = vrot.slane %v251, 2
        %v514 = vrot.slane %v255, 2
        %v515 = vrot.slane %v259, 2
        %v516 = vrot.slane %v263, 2
        %v517 = vrot.slane %v267, 2
        %v518 = vrot.slane %v271, 2
        %v519 = vrot.slane %v284, 2
        %520 = vrot.lane.b32.xlu0 %v511, 122
        %v521 = vpop.permute.xlu0 %520
        %522 = vrot.lane.b32.xlu0 %v512, 122
        %v523 = vpop.permute.xlu0 %522
        %524 = vrot.lane.b32.xlu0 %v513, 122
        %v525 = vpop.permute.xlu0 %524
        %526 = vrot.lane.b32.xlu0 %v514, 122
        %v527 = vpop.permute.xlu0 %526
        %528 = vrot.lane.b32.xlu0 %v515, 122
        %v529 = vpop.permute.xlu0 %528
        %530 = vrot.lane.b32.xlu0 %v516, 122
        %v531 = vpop.permute.xlu0 %530
        %532 = vrot.lane.b32.xlu0 %v517, 122
        %v533 = vpop.permute.xlu0 %532
        %534 = vrot.lane.b32.xlu0 %v518, 122
        %v535 = vpop.permute.xlu0 %534
        %536 = vrot.lane.b32.xlu0 %v519, 122
        %v537 = vpop.permute.xlu0 %536
        %vm538 = vcmask 998400
        %v539 = vsel %vm538, %v521, %v523
        %v540 = vsel %vm538, %v523, %v525
        %v541 = vsel %vm538, %v525, %v527
        %v542 = vsel %vm538, %v527, %v529
        %v543 = vsel %vm538, %v529, %v531
        %v544 = vsel %vm538, %v531, %v533
        %v545 = vsel %vm538, %v533, %v535
        %v546 = vsel %vm538, %v535, %v537
        %v556 = vrot.slane %v243, 1
        %v557 = vrot.slane %v247, 1
        %v558 = vrot.slane %v251, 1
        %v559 = vrot.slane %v255, 1
        %v560 = vrot.slane %v259, 1
        %v561 = vrot.slane %v263, 1
        %v562 = vrot.slane %v267, 1
        %v563 = vrot.slane %v271, 1
        %v564 = vrot.slane %v284, 1
        %565 = vrot.lane.b32.xlu0 %v556, 121
        %v566 = vpop.permute.xlu0 %565
        %567 = vrot.lane.b32.xlu0 %v557, 121
        %v568 = vpop.permute.xlu0 %567
        %569 = vrot.lane.b32.xlu0 %v558, 121
        %v570 = vpop.permute.xlu0 %569
        %571 = vrot.lane.b32.xlu0 %v559, 121
        %v572 = vpop.permute.xlu0 %571
        %573 = vrot.lane.b32.xlu0 %v560, 121
        %v574 = vpop.permute.xlu0 %573
        %575 = vrot.lane.b32.xlu0 %v561, 121
        %v576 = vpop.permute.xlu0 %575
        %577 = vrot.lane.b32.xlu0 %v562, 121
        %v578 = vpop.permute.xlu0 %577
        %579 = vrot.lane.b32.xlu0 %v563, 121
        %v580 = vpop.permute.xlu0 %579
        %581 = vrot.lane.b32.xlu0 %v564, 121
        %v582 = vpop.permute.xlu0 %581
        %vm583 = vcmask 990208
        %v584 = vsel %vm583, %v566, %v568
        %v585 = vsel %vm583, %v568, %v570
        %v586 = vsel %vm583, %v570, %v572
        %v587 = vsel %vm583, %v572, %v574
        %v588 = vsel %vm583, %v574, %v576
        %v589 = vsel %vm583, %v576, %v578
        %v590 = vsel %vm583, %v578, %v580
        %v591 = vsel %vm583, %v580, %v582
        %vm601 = vcmask 1040384
        %v602 = vsel %vm601, %v243, %v314
        %v603 = vsel %vm601, %v247, %v315
        %v604 = vsel %vm601, %v251, %v316
        %v605 = vsel %vm601, %v255, %v317
        %v606 = vsel %vm601, %v259, %v318
        %v607 = vsel %vm601, %v263, %v319
        %v608 = vsel %vm601, %v267, %v320
        %v609 = vsel %vm601, %v271, %v321
        %v610 = vsel %vm601, %v284, %v312
        %vm611 = vcmask 1041408
        %v612 = vsel %vm611, %v602, %v359
        %v613 = vsel %vm611, %v603, %v360
        %v614 = vsel %vm611, %v604, %v361
        %v615 = vsel %vm611, %v605, %v362
        %v616 = vsel %vm611, %v606, %v363
        %v617 = vsel %vm611, %v607, %v364
        %v618 = vsel %vm611, %v608, %v365
        %v619 = vsel %vm611, %v609, %v366
        %v620 = vsel %vm611, %v610, %v357
        %vm621 = vcmask 1042432
        %v622 = vsel %vm621, %v612, %v404
        %v623 = vsel %vm621, %v613, %v405
        %v624 = vsel %vm621, %v614, %v406
        %v625 = vsel %vm621, %v615, %v407
        %v626 = vsel %vm621, %v616, %v408
        %v627 = vsel %vm621, %v617, %v409
        %v628 = vsel %vm621, %v618, %v410
        %v629 = vsel %vm621, %v619, %v411
        %v630 = vsel %vm621, %v620, %v402
        %vm631 = vcmask 1043456
        %v632 = vsel %vm631, %v622, %v449
        %v633 = vsel %vm631, %v623, %v450
        %v634 = vsel %vm631, %v624, %v451
        %v635 = vsel %vm631, %v625, %v452
        %v636 = vsel %vm631, %v626, %v453
        %v637 = vsel %vm631, %v627, %v454
        %v638 = vsel %vm631, %v628, %v455
        %v639 = vsel %vm631, %v629, %v456
        %v640 = vsel %vm631, %v630, %v447
        %vm641 = vcmask 1044480
        %v642 = vsel %vm641, %v632, %v494
        %v643 = vsel %vm641, %v633, %v495
        %v644 = vsel %vm641, %v634, %v496
        %v645 = vsel %vm641, %v635, %v497
        %v646 = vsel %vm641, %v636, %v498
        %v647 = vsel %vm641, %v637, %v499
        %v648 = vsel %vm641, %v638, %v500
        %v649 = vsel %vm641, %v639, %v501
        %v650 = vsel %vm641, %v640, %v492
        %vm651 = vcmask 1045504
        %v652 = vsel %vm651, %v642, %v539
        %v653 = vsel %vm651, %v643, %v540
        %v654 = vsel %vm651, %v644, %v541
        %v655 = vsel %vm651, %v645, %v542
        %v656 = vsel %vm651, %v646, %v543
        %v657 = vsel %vm651, %v647, %v544
        %v658 = vsel %vm651, %v648, %v545
        %v659 = vsel %vm651, %v649, %v546
        %v660 = vsel %vm651, %v650, %v537
        %vm661 = vcmask 1046528
        %v662 = vsel %vm661, %v652, %v584
        %v663 = vsel %vm661, %v653, %v585
        %v664 = vsel %vm661, %v654, %v586
        %v665 = vsel %vm661, %v655, %v587
        %v666 = vsel %vm661, %v656, %v588
        %v667 = vsel %vm661, %v657, %v589
        %v668 = vsel %vm661, %v658, %v590
        %v669 = vsel %vm661, %v659, %v591
        %v670 = vsel %vm661, %v660, %v582
        %671 = vst [vmem:[#allocation2] sm:$0xff] %v662
        %672 = vst [vmem:[#allocation2 + $0x8] sm:$0xff] %v663
        %673 = vst [vmem:[#allocation2 + $0x10] sm:$0xff] %v664
        %674 = vst [vmem:[#allocation2 + $0x18] sm:$0xff] %v665
        %675 = vst [vmem:[#allocation2 + $0x20] sm:$0xff] %v666
        %676 = vst [vmem:[#allocation2 + $0x28] sm:$0xff] %v667
        %677 = vst [vmem:[#allocation2 + $0x30] sm:$0xff] %v668
        %678 = vst [vmem:[#allocation2 + $0x38] sm:$0xff] %v669
        %688 = vrot.lane.b32.xlu0 %v662, 120
        %v689 = vpop.permute.xlu0 %688
        %690 = vrot.lane.b32.xlu0 %v663, 120
        %v691 = vpop.permute.xlu0 %690
        %692 = vrot.lane.b32.xlu0 %v664, 120
        %v693 = vpop.permute.xlu0 %692
        %694 = vrot.lane.b32.xlu0 %v665, 120
        %v695 = vpop.permute.xlu0 %694
        %696 = vrot.lane.b32.xlu0 %v666, 120
        %v697 = vpop.permute.xlu0 %696
        %698 = vrot.lane.b32.xlu0 %v667, 120
        %v699 = vpop.permute.xlu0 %698
        %700 = vrot.lane.b32.xlu0 %v668, 120
        %v701 = vpop.permute.xlu0 %700
        %702 = vrot.lane.b32.xlu0 %v669, 120
        %v703 = vpop.permute.xlu0 %702
        %704 = vrot.lane.b32.xlu0 %v670, 120
        %v705 = vpop.permute.xlu0 %704
        %vm706 = vcmask 982016
        %v707 = vsel %vm706, %v689, %v691
        %v708 = vsel %vm706, %v691, %v693
        %v709 = vsel %vm706, %v693, %v695
        %v710 = vsel %vm706, %v695, %v697
        %v711 = vsel %vm706, %v697, %v699
        %v712 = vsel %vm706, %v699, %v701
        %v713 = vsel %vm706, %v701, %v703
        %v714 = vsel %vm706, %v703, %v705
        %723 = vst [vmem:[#allocation2 + $0x40] sm:$0xff] %v707
        %724 = vst [vmem:[#allocation2 + $0x48] sm:$0xff] %v708
        %725 = vst [vmem:[#allocation2 + $0x50] sm:$0xff] %v709
        %726 = vst [vmem:[#allocation2 + $0x58] sm:$0xff] %v710
        %727 = vst [vmem:[#allocation2 + $0x60] sm:$0xff] %v711
        %728 = vst [vmem:[#allocation2 + $0x68] sm:$0xff] %v712
        %729 = vst [vmem:[#allocation2 + $0x70] sm:$0xff] %v713
        %730 = vst [vmem:[#allocation2 + $0x78] sm:$0xff] %v714
        %731 = vrot.lane.b32.xlu0 %v662, 112
        %v732 = vpop.permute.xlu0 %731
        %733 = vrot.lane.b32.xlu0 %v663, 112
        %v734 = vpop.permute.xlu0 %733
        %735 = vrot.lane.b32.xlu0 %v664, 112
        %v736 = vpop.permute.xlu0 %735
        %737 = vrot.lane.b32.xlu0 %v665, 112
        %v738 = vpop.permute.xlu0 %737
        %739 = vrot.lane.b32.xlu0 %v666, 112
        %v740 = vpop.permute.xlu0 %739
        %741 = vrot.lane.b32.xlu0 %v667, 112
        %v742 = vpop.permute.xlu0 %741
        %743 = vrot.lane.b32.xlu0 %v668, 112
        %v744 = vpop.permute.xlu0 %743
        %745 = vrot.lane.b32.xlu0 %v669, 112
        %v746 = vpop.permute.xlu0 %745
        %747 = vrot.lane.b32.xlu0 %v670, 112
        %v748 = vpop.permute.xlu0 %747
        %vm749 = vcmask 916480
        %v750 = vsel %vm749, %v732, %v734
        %v751 = vsel %vm749, %v734, %v736
        %v752 = vsel %vm749, %v736, %v738
        %v753 = vsel %vm749, %v738, %v740
        %v754 = vsel %vm749, %v740, %v742
        %v755 = vsel %vm749, %v742, %v744
        %v756 = vsel %vm749, %v744, %v746
        %v757 = vsel %vm749, %v746, %v748
        %766 = vst [vmem:[#allocation2 + $0x80] sm:$0xff] %v750
        %767 = vst [vmem:[#allocation2 + $0x88] sm:$0xff] %v751
        %768 = vst [vmem:[#allocation2 + $0x90] sm:$0xff] %v752
        %769 = vst [vmem:[#allocation2 + $0x98] sm:$0xff] %v753
        %770 = vst [vmem:[#allocation2 + $0xa0] sm:$0xff] %v754
        %771 = vst [vmem:[#allocation2 + $0xa8] sm:$0xff] %v755
        %772 = vst [vmem:[#allocation2 + $0xb0] sm:$0xff] %v756
        %773 = vst [vmem:[#allocation2 + $0xb8] sm:$0xff] %v757
        %774 = vrot.lane.b32.xlu0 %v662, 104
        %v775 = vpop.permute.xlu0 %774
        %776 = vrot.lane.b32.xlu0 %v663, 104
        %v777 = vpop.permute.xlu0 %776
        %778 = vrot.lane.b32.xlu0 %v664, 104
        %v779 = vpop.permute.xlu0 %778
        %780 = vrot.lane.b32.xlu0 %v665, 104
        %v781 = vpop.permute.xlu0 %780
        %782 = vrot.lane.b32.xlu0 %v666, 104
        %v783 = vpop.permute.xlu0 %782
        %784 = vrot.lane.b32.xlu0 %v667, 104
        %v785 = vpop.permute.xlu0 %784
        %786 = vrot.lane.b32.xlu0 %v668, 104
        %v787 = vpop.permute.xlu0 %786
        %788 = vrot.lane.b32.xlu0 %v669, 104
        %v789 = vpop.permute.xlu0 %788
        %790 = vrot.lane.b32.xlu0 %v670, 104
        %v791 = vpop.permute.xlu0 %790
        %vm792 = vcmask 850944
        %v793 = vsel %vm792, %v775, %v777
        %v794 = vsel %vm792, %v777, %v779
        %v795 = vsel %vm792, %v779, %v781
        %v796 = vsel %vm792, %v781, %v783
        %v797 = vsel %vm792, %v783, %v785
        %v798 = vsel %vm792, %v785, %v787
        %v799 = vsel %vm792, %v787, %v789
        %v800 = vsel %vm792, %v789, %v791
        %809 = vst [vmem:[#allocation2 + $0xc0] sm:$0xff] %v793
        %810 = vst [vmem:[#allocation2 + $0xc8] sm:$0xff] %v794
        %811 = vst [vmem:[#allocation2 + $0xd0] sm:$0xff] %v795
        %812 = vst [vmem:[#allocation2 + $0xd8] sm:$0xff] %v796
        %813 = vst [vmem:[#allocation2 + $0xe0] sm:$0xff] %v797
        %814 = vst [vmem:[#allocation2 + $0xe8] sm:$0xff] %v798
        %815 = vst [vmem:[#allocation2 + $0xf0] sm:$0xff] %v799
        %816 = vst [vmem:[#allocation2 + $0xf8] sm:$0xff] %v800
        %817 = vrot.lane.b32.xlu0 %v662, 96
        %v818 = vpop.permute.xlu0 %817
        %819 = vrot.lane.b32.xlu0 %v663, 96
        %v820 = vpop.permute.xlu0 %819
        %821 = vrot.lane.b32.xlu0 %v664, 96
        %v822 = vpop.permute.xlu0 %821
        %823 = vrot.lane.b32.xlu0 %v665, 96
        %v824 = vpop.permute.xlu0 %823
        %825 = vrot.lane.b32.xlu0 %v666, 96
        %v826 = vpop.permute.xlu0 %825
        %827 = vrot.lane.b32.xlu0 %v667, 96
        %v828 = vpop.permute.xlu0 %827
        %829 = vrot.lane.b32.xlu0 %v668, 96
        %v830 = vpop.permute.xlu0 %829
        %831 = vrot.lane.b32.xlu0 %v669, 96
        %v832 = vpop.permute.xlu0 %831
        %833 = vrot.lane.b32.xlu0 %v670, 96
        %v834 = vpop.permute.xlu0 %833
        %vm835 = vcmask 785408
        %v836 = vsel %vm835, %v818, %v820
        %v837 = vsel %vm835, %v820, %v822
        %v838 = vsel %vm835, %v822, %v824
        %v839 = vsel %vm835, %v824, %v826
        %v840 = vsel %vm835, %v826, %v828
        %v841 = vsel %vm835, %v828, %v830
        %v842 = vsel %vm835, %v830, %v832
        %v843 = vsel %vm835, %v832, %v834
        %852 = vst [vmem:[#allocation2 + $0x100] sm:$0xff] %v836
        %853 = vst [vmem:[#allocation2 + $0x108] sm:$0xff] %v837
        %854 = vst [vmem:[#allocation2 + $0x110] sm:$0xff] %v838
        %855 = vst [vmem:[#allocation2 + $0x118] sm:$0xff] %v839
        %856 = vst [vmem:[#allocation2 + $0x120] sm:$0xff] %v840
        %857 = vst [vmem:[#allocation2 + $0x128] sm:$0xff] %v841
        %858 = vst [vmem:[#allocation2 + $0x130] sm:$0xff] %v842
        %859 = vst [vmem:[#allocation2 + $0x138] sm:$0xff] %v843
        %860 = vrot.lane.b32.xlu0 %v662, 88
        %v861 = vpop.permute.xlu0 %860
        %862 = vrot.lane.b32.xlu0 %v663, 88
        %v863 = vpop.permute.xlu0 %862
        %864 = vrot.lane.b32.xlu0 %v664, 88
        %v865 = vpop.permute.xlu0 %864
        %866 = vrot.lane.b32.xlu0 %v665, 88
        %v867 = vpop.permute.xlu0 %866
        %868 = vrot.lane.b32.xlu0 %v666, 88
        %v869 = vpop.permute.xlu0 %868
        %870 = vrot.lane.b32.xlu0 %v667, 88
        %v871 = vpop.permute.xlu0 %870
        %872 = vrot.lane.b32.xlu0 %v668, 88
        %v873 = vpop.permute.xlu0 %872
        %874 = vrot.lane.b32.xlu0 %v669, 88
        %v875 = vpop.permute.xlu0 %874
        %876 = vrot.lane.b32.xlu0 %v670, 88
        %v877 = vpop.permute.xlu0 %876
        %vm878 = vcmask 719872
        %v879 = vsel %vm878, %v861, %v863
        %v880 = vsel %vm878, %v863, %v865
        %v881 = vsel %vm878, %v865, %v867
        %v882 = vsel %vm878, %v867, %v869
        %v883 = vsel %vm878, %v869, %v871
        %v884 = vsel %vm878, %v871, %v873
        %v885 = vsel %vm878, %v873, %v875
        %v886 = vsel %vm878, %v875, %v877
        %895 = vst [vmem:[#allocation2 + $0x140] sm:$0xff] %v879
        %896 = vst [vmem:[#allocation2 + $0x148] sm:$0xff] %v880
        %897 = vst [vmem:[#allocation2 + $0x150] sm:$0xff] %v881
        %898 = vst [vmem:[#allocation2 + $0x158] sm:$0xff] %v882
        %899 = vst [vmem:[#allocation2 + $0x160] sm:$0xff] %v883
        %900 = vst [vmem:[#allocation2 + $0x168] sm:$0xff] %v884
        %901 = vst [vmem:[#allocation2 + $0x170] sm:$0xff] %v885
        %902 = vst [vmem:[#allocation2 + $0x178] sm:$0xff] %v886
        %903 = vrot.lane.b32.xlu0 %v662, 80
        %v904 = vpop.permute.xlu0 %903
        %905 = vrot.lane.b32.xlu0 %v663, 80
        %v906 = vpop.permute.xlu0 %905
        %907 = vrot.lane.b32.xlu0 %v664, 80
        %v908 = vpop.permute.xlu0 %907
        %909 = vrot.lane.b32.xlu0 %v665, 80
        %v910 = vpop.permute.xlu0 %909
        %911 = vrot.lane.b32.xlu0 %v666, 80
        %v912 = vpop.permute.xlu0 %911
        %913 = vrot.lane.b32.xlu0 %v667, 80
        %v914 = vpop.permute.xlu0 %913
        %915 = vrot.lane.b32.xlu0 %v668, 80
        %v916 = vpop.permute.xlu0 %915
        %917 = vrot.lane.b32.xlu0 %v669, 80
        %v918 = vpop.permute.xlu0 %917
        %919 = vrot.lane.b32.xlu0 %v670, 80
        %v920 = vpop.permute.xlu0 %919
        %vm921 = vcmask 654336
        %v922 = vsel %vm921, %v904, %v906
        %v923 = vsel %vm921, %v906, %v908
        %v924 = vsel %vm921, %v908, %v910
        %v925 = vsel %vm921, %v910, %v912
        %v926 = vsel %vm921, %v912, %v914
        %v927 = vsel %vm921, %v914, %v916
        %v928 = vsel %vm921, %v916, %v918
        %v929 = vsel %vm921, %v918, %v920
        %938 = vst [vmem:[#allocation2 + $0x180] sm:$0xff] %v922
        %939 = vst [vmem:[#allocation2 + $0x188] sm:$0xff] %v923
        %940 = vst [vmem:[#allocation2 + $0x190] sm:$0xff] %v924
        %941 = vst [vmem:[#allocation2 + $0x198] sm:$0xff] %v925
        %942 = vst [vmem:[#allocation2 + $0x1a0] sm:$0xff] %v926
        %943 = vst [vmem:[#allocation2 + $0x1a8] sm:$0xff] %v927
        %944 = vst [vmem:[#allocation2 + $0x1b0] sm:$0xff] %v928
        %945 = vst [vmem:[#allocation2 + $0x1b8] sm:$0xff] %v929
        %946 = vrot.lane.b32.xlu0 %v662, 72
        %v947 = vpop.permute.xlu0 %946
        %948 = vrot.lane.b32.xlu0 %v663, 72
        %v949 = vpop.permute.xlu0 %948
        %950 = vrot.lane.b32.xlu0 %v664, 72
        %v951 = vpop.permute.xlu0 %950
        %952 = vrot.lane.b32.xlu0 %v665, 72
        %v953 = vpop.permute.xlu0 %952
        %954 = vrot.lane.b32.xlu0 %v666, 72
        %v955 = vpop.permute.xlu0 %954
        %956 = vrot.lane.b32.xlu0 %v667, 72
        %v957 = vpop.permute.xlu0 %956
        %958 = vrot.lane.b32.xlu0 %v668, 72
        %v959 = vpop.permute.xlu0 %958
        %960 = vrot.lane.b32.xlu0 %v669, 72
        %v961 = vpop.permute.xlu0 %960
        %962 = vrot.lane.b32.xlu0 %v670, 72
        %v963 = vpop.permute.xlu0 %962
        %vm964 = vcmask 588800
        %v965 = vsel %vm964, %v947, %v949
        %v966 = vsel %vm964, %v949, %v951
        %v967 = vsel %vm964, %v951, %v953
        %v968 = vsel %vm964, %v953, %v955
        %v969 = vsel %vm964, %v955, %v957
        %v970 = vsel %vm964, %v957, %v959
        %v971 = vsel %vm964, %v959, %v961
        %v972 = vsel %vm964, %v961, %v963
        %981 = vst [vmem:[#allocation2 + $0x1c0] sm:$0xff] %v965
        %982 = vst [vmem:[#allocation2 + $0x1c8] sm:$0xff] %v966
        %983 = vst [vmem:[#allocation2 + $0x1d0] sm:$0xff] %v967
        %984 = vst [vmem:[#allocation2 + $0x1d8] sm:$0xff] %v968
        %985 = vst [vmem:[#allocation2 + $0x1e0] sm:$0xff] %v969
        %986 = vst [vmem:[#allocation2 + $0x1e8] sm:$0xff] %v970
        %987 = vst [vmem:[#allocation2 + $0x1f0] sm:$0xff] %v971
        %988 = vst [vmem:[#allocation2 + $0x1f8] sm:$0xff] %v972
        %989 = vrot.lane.b32.xlu0 %v662, 64
        %v990 = vpop.permute.xlu0 %989
        %991 = vrot.lane.b32.xlu0 %v663, 64
        %v992 = vpop.permute.xlu0 %991
        %993 = vrot.lane.b32.xlu0 %v664, 64
        %v994 = vpop.permute.xlu0 %993
        %995 = vrot.lane.b32.xlu0 %v665, 64
        %v996 = vpop.permute.xlu0 %995
        %997 = vrot.lane.b32.xlu0 %v666, 64
        %v998 = vpop.permute.xlu0 %997
        %999 = vrot.lane.b32.xlu0 %v667, 64
        %v1000 = vpop.permute.xlu0 %999
        %1001 = vrot.lane.b32.xlu0 %v668, 64
        %v1002 = vpop.permute.xlu0 %1001
        %1003 = vrot.lane.b32.xlu0 %v669, 64
        %v1004 = vpop.permute.xlu0 %1003
        %1005 = vrot.lane.b32.xlu0 %v670, 64
        %v1006 = vpop.permute.xlu0 %1005
        %vm1007 = vcmask 523264
        %v1008 = vsel %vm1007, %v990, %v992
        %v1009 = vsel %vm1007, %v992, %v994
        %v1010 = vsel %vm1007, %v994, %v996
        %v1011 = vsel %vm1007, %v996, %v998
        %v1012 = vsel %vm1007, %v998, %v1000
        %v1013 = vsel %vm1007, %v1000, %v1002
        %v1014 = vsel %vm1007, %v1002, %v1004
        %v1015 = vsel %vm1007, %v1004, %v1006
        %1024 = vst [vmem:[#allocation2 + $0x200] sm:$0xff] %v1008
        %1025 = vst [vmem:[#allocation2 + $0x208] sm:$0xff] %v1009
        %1026 = vst [vmem:[#allocation2 + $0x210] sm:$0xff] %v1010
        %1027 = vst [vmem:[#allocation2 + $0x218] sm:$0xff] %v1011
        %1028 = vst [vmem:[#allocation2 + $0x220] sm:$0xff] %v1012
        %1029 = vst [vmem:[#allocation2 + $0x228] sm:$0xff] %v1013
        %1030 = vst [vmem:[#allocation2 + $0x230] sm:$0xff] %v1014
        %1031 = vst [vmem:[#allocation2 + $0x238] sm:$0xff] %v1015
        %v1032 = vld [vmem:[%s2] sm:$0xff]
        %v1033 = vld [vmem:[#allocation2] sm:$0xff]
        %v1034 = vld [vmem:[#allocation2 + $0x8] sm:$0xff]
        %v1035 = vld [vmem:[#allocation2 + $0x10] sm:$0xff]
        %v1036 = vld [vmem:[#allocation2 + $0x18] sm:$0xff]
        %v1037 = vld [vmem:[#allocation2 + $0x20] sm:$0xff]
        %v1038 = vld [vmem:[#allocation2 + $0x28] sm:$0xff]
        %v1039 = vld [vmem:[#allocation2 + $0x30] sm:$0xff]
        %v1040 = vld [vmem:[#allocation2 + $0x38] sm:$0xff]
        %v1041 = vld [vmem:[#allocation2 + $0x40] sm:$0xff]
        %v1042 = vld [vmem:[#allocation2 + $0x48] sm:$0xff]
        %v1043 = vld [vmem:[#allocation2 + $0x50] sm:$0xff]
        %v1044 = vld [vmem:[#allocation2 + $0x58] sm:$0xff]
        %v1045 = vld [vmem:[#allocation2 + $0x60] sm:$0xff]
        %v1046 = vld [vmem:[#allocation2 + $0x68] sm:$0xff]
        %v1047 = vld [vmem:[#allocation2 + $0x70] sm:$0xff]
        %v1048 = vld [vmem:[#allocation2 + $0x78] sm:$0xff]
        %v1049 = vld [vmem:[#allocation2 + $0x80] sm:$0xff]
        %v1050 = vld [vmem:[#allocation2 + $0x88] sm:$0xff]
        %v1051 = vld [vmem:[#allocation2 + $0x90] sm:$0xff]
        %v1052 = vld [vmem:[#allocation2 + $0x98] sm:$0xff]
        %v1053 = vld [vmem:[#allocation2 + $0xa0] sm:$0xff]
        %v1054 = vld [vmem:[#allocation2 + $0xa8] sm:$0xff]
        %v1055 = vld [vmem:[#allocation2 + $0xb0] sm:$0xff]
        %v1056 = vld [vmem:[#allocation2 + $0xb8] sm:$0xff]
        %v1057 = vld [vmem:[#allocation2 + $0xc0] sm:$0xff]
        %v1058 = vld [vmem:[#allocation2 + $0xc8] sm:$0xff]
        %v1059 = vld [vmem:[#allocation2 + $0xd0] sm:$0xff]
        %v1060 = vld [vmem:[#allocation2 + $0xd8] sm:$0xff]
        %v1061 = vld [vmem:[#allocation2 + $0xe0] sm:$0xff]
        %v1062 = vld [vmem:[#allocation2 + $0xe8] sm:$0xff]
        %v1063 = vld [vmem:[#allocation2 + $0xf0] sm:$0xff]
        %v1064 = vld [vmem:[#allocation2 + $0xf8] sm:$0xff]
        %v1065 = vld [vmem:[#allocation2 + $0x100] sm:$0xff]
        %v1066 = vld [vmem:[#allocation2 + $0x108] sm:$0xff]
        %v1067 = vld [vmem:[#allocation2 + $0x110] sm:$0xff]
        %v1068 = vld [vmem:[#allocation2 + $0x118] sm:$0xff]
        %v1069 = vld [vmem:[#allocation2 + $0x120] sm:$0xff]
        %v1070 = vld [vmem:[#allocation2 + $0x128] sm:$0xff]
        %v1071 = vld [vmem:[#allocation2 + $0x130] sm:$0xff]
        %v1072 = vld [vmem:[#allocation2 + $0x138] sm:$0xff]
        %v1073 = vld [vmem:[#allocation2 + $0x140] sm:$0xff]
        %v1074 = vld [vmem:[#allocation2 + $0x148] sm:$0xff]
        %v1075 = vld [vmem:[#allocation2 + $0x150] sm:$0xff]
        %v1076 = vld [vmem:[#allocation2 + $0x158] sm:$0xff]
        %v1077 = vld [vmem:[#allocation2 + $0x160] sm:$0xff]
        %v1078 = vld [vmem:[#allocation2 + $0x168] sm:$0xff]
        %v1079 = vld [vmem:[#allocation2 + $0x170] sm:$0xff]
        %v1080 = vld [vmem:[#allocation2 + $0x178] sm:$0xff]
        %v1081 = vld [vmem:[#allocation2 + $0x180] sm:$0xff]
        %v1082 = vld [vmem:[#allocation2 + $0x188] sm:$0xff]
        %v1083 = vld [vmem:[#allocation2 + $0x190] sm:$0xff]
        %v1084 = vld [vmem:[#allocation2 + $0x198] sm:$0xff]
        %v1085 = vld [vmem:[#allocation2 + $0x1a0] sm:$0xff]
        %v1086 = vld [vmem:[#allocation2 + $0x1a8] sm:$0xff]
        %v1087 = vld [vmem:[#allocation2 + $0x1b0] sm:$0xff]
        %v1088 = vld [vmem:[#allocation2 + $0x1b8] sm:$0xff]
        %v1089 = vld [vmem:[#allocation2 + $0x1c0] sm:$0xff]
        %v1090 = vld [vmem:[#allocation2 + $0x1c8] sm:$0xff]
        %v1091 = vld [vmem:[#allocation2 + $0x1d0] sm:$0xff]
        %v1092 = vld [vmem:[#allocation2 + $0x1d8] sm:$0xff]
        %v1093 = vld [vmem:[#allocation2 + $0x1e0] sm:$0xff]
        %v1094 = vld [vmem:[#allocation2 + $0x1e8] sm:$0xff]
        %v1095 = vld [vmem:[#allocation2 + $0x1f0] sm:$0xff]
        %v1096 = vld [vmem:[#allocation2 + $0x1f8] sm:$0xff]
        %v1097 = vld [vmem:[#allocation2 + $0x200] sm:$0xff]
        %v1098 = vld [vmem:[#allocation2 + $0x208] sm:$0xff]
        %v1099 = vld [vmem:[#allocation2 + $0x210] sm:$0xff]
        %v1100 = vld [vmem:[#allocation2 + $0x218] sm:$0xff]
        %v1101 = vld [vmem:[#allocation2 + $0x220] sm:$0xff]
        %v1102 = vld [vmem:[#allocation2 + $0x228] sm:$0xff]
        %v1103 = vld [vmem:[#allocation2 + $0x230] sm:$0xff]
        %v1104 = vld [vmem:[#allocation2 + $0x238] sm:$0xff]
        %v1106 = vsel %vm964, %v1032, 0
        %1108 = vmatprep.subr.mxu0 %v1034
        %1109 = vmatpush1.msra.mxu0 %v1033
        %1110 = vmatprep.subr.mxu0 %v1042
        %1111 = vmatpush1.msra.mxu0 %v1041
        %1112 = vmatprep.subr.mxu0 %v1050
        %1113 = vmatpush1.msra.mxu0 %v1049
        %1114 = vmatprep.subr.mxu0 %v1058
        %1115 = vmatpush1.msra.mxu0 %v1057
        %1116 = vmatprep.subr.mxu0 %v1066
        %1117 = vmatpush1.msra.mxu0 %v1065
        %1118 = vmatprep.subr.mxu0 %v1074
        %1119 = vmatpush1.msra.mxu0 %v1073
        %1120 = vmatprep.subr.mxu0 %v1082
        %1121 = vmatpush1.msra.mxu0 %v1081
        %1122 = vmatprep.subr.mxu0 %v1090
        %1123 = vmatpush1.msra.mxu0 %v1089
        %1124 = vmatprep.subr.mxu0 %v1098
        %1125 = vmatpush1.msra.mxu0 %v1097
        %1126 = vmatprep.subr.mxu0 0.0
        %1127 = vmatpush1.msra.mxu0 0.0
        %1128 = vmatprep.subr.mxu0 0.0
        %1129 = vmatpush1.msra.mxu0 0.0
        %1130 = vmatprep.subr.mxu0 0.0
        %1131 = vmatpush1.msra.mxu0 0.0
        %1132 = vmatprep.subr.mxu0 0.0
        %1133 = vmatpush1.msra.mxu0 0.0
        %1134 = vmatprep.subr.mxu0 0.0
        %1135 = vmatpush1.msra.mxu0 0.0
        %1136 = vmatprep.subr.mxu0 0.0
        %1137 = vmatpush1.msra.mxu0 0.0
        %1138 = vmatprep.subr.mxu0 0.0
        %1139 = vmatpush1.msra.mxu0 0.0
        %1140 = vmatprep.subr.mxu0 0.0
        %1141 = vmatpush1.msra.mxu0 0.0
        %1142 = vmatprep.subr.mxu0 0.0
        %1143 = vmatpush1.msra.mxu0 0.0
        %1144 = vmatprep.subr.mxu0 0.0
        %1145 = vmatpush1.msra.mxu0 0.0
        %1146 = vmatprep.subr.mxu0 0.0
        %1147 = vmatpush1.msra.mxu0 0.0
        %1148 = vmatprep.subr.mxu0 0.0
        %1149 = vmatpush1.msra.mxu0 0.0
        %1150 = vmatprep.subr.mxu0 0.0
        %1151 = vmatpush1.msra.mxu0 0.0
        %1152 = vmatprep.subr.mxu0 0.0
        %1153 = vmatpush1.msra.mxu0 0.0
        %1154 = vmatprep.subr.mxu0 0.0
        %1155 = vmatpush1.msra.mxu0 0.0
        %1156 = vmatprep.subr.mxu0 0.0
        %1157 = vmatpush1.msra.mxu0 0.0
        %1158 = vmatprep.subr.mxu0 0.0
        %1159 = vmatpush1.msra.mxu0 0.0
        %1160 = vmatprep.subr.mxu0 0.0
        %1161 = vmatpush1.msra.mxu0 0.0
        %1162 = vmatprep.subr.mxu0 0.0
        %1163 = vmatpush1.msra.mxu0 0.0
        %1164 = vmatprep.subr.mxu0 0.0
        %1165 = vmatpush1.msra.mxu0 0.0
        %1166 = vmatprep.subr.mxu0 0.0
        %1167 = vmatpush1.msra.mxu0 0.0
        %1168 = vmatprep.subr.mxu0 0.0
        %1169 = vmatpush1.msra.mxu0 0.0
        %1170 = vmatprep.subr.mxu0 0.0
        %1171 = vmatpush1.msra.mxu0 0.0
        %1172 = vmatprep.mubr.f32.mxu0 0.0
        %1173 = vmatmul.mubr.f32.gmra.mrb[0].mxu0 %v1106
        %v1174 = vpop.f32.mrb[0].mxu0
        %v1175 = vadd.f32 0.0, %v1174
        %v1176 = vpop.f32.mrb[0].mxu0
        %v1177 = vadd.f32 0.0, %v1176
        %1178 = vdwg.mxu0
        %1179 = vmatprep.subr.mxu0 %v1036
        %1180 = vmatpush1.msra.mxu0 %v1035
        %1181 = vmatprep.subr.mxu0 %v1044
        %1182 = vmatpush1.msra.mxu0 %v1043
        %1183 = vmatprep.subr.mxu0 %v1052
        %1184 = vmatpush1.msra.mxu0 %v1051
        %1185 = vmatprep.subr.mxu0 %v1060
        %1186 = vmatpush1.msra.mxu0 %v1059
        %1187 = vmatprep.subr.mxu0 %v1068
        %1188 = vmatpush1.msra.mxu0 %v1067
        %1189 = vmatprep.subr.mxu0 %v1076
        %1190 = vmatpush1.msra.mxu0 %v1075
        %1191 = vmatprep.subr.mxu0 %v1084
        %1192 = vmatpush1.msra.mxu0 %v1083
        %1193 = vmatprep.subr.mxu0 %v1092
        %1194 = vmatpush1.msra.mxu0 %v1091
        %1195 = vmatprep.subr.mxu0 %v1100
        %1196 = vmatpush1.msra.mxu0 %v1099
        %1197 = vmatprep.subr.mxu0 0.0
        %1198 = vmatpush1.msra.mxu0 0.0
        %1199 = vmatprep.subr.mxu0 0.0
        %1200 = vmatpush1.msra.mxu0 0.0
        %1201 = vmatprep.subr.mxu0 0.0
        %1202 = vmatpush1.msra.mxu0 0.0
        %1203 = vmatprep.subr.mxu0 0.0
        %1204 = vmatpush1.msra.mxu0 0.0
        %1205 = vmatprep.subr.mxu0 0.0
        %1206 = vmatpush1.msra.mxu0 0.0
        %1207 = vmatprep.subr.mxu0 0.0
        %1208 = vmatpush1.msra.mxu0 0.0
        %1209 = vmatprep.subr.mxu0 0.0
        %1210 = vmatpush1.msra.mxu0 0.0
        %1211 = vmatprep.subr.mxu0 0.0
        %1212 = vmatpush1.msra.mxu0 0.0
        %1213 = vmatprep.subr.mxu0 0.0
        %1214 = vmatpush1.msra.mxu0 0.0
        %1215 = vmatprep.subr.mxu0 0.0
        %1216 = vmatpush1.msra.mxu0 0.0
        %1217 = vmatprep.subr.mxu0 0.0
        %1218 = vmatpush1.msra.mxu0 0.0
        %1219 = vmatprep.subr.mxu0 0.0
        %1220 = vmatpush1.msra.mxu0 0.0
        %1221 = vmatprep.subr.mxu0 0.0
        %1222 = vmatpush1.msra.mxu0 0.0
        %1223 = vmatprep.subr.mxu0 0.0
        %1224 = vmatpush1.msra.mxu0 0.0
        %1225 = vmatprep.subr.mxu0 0.0
        %1226 = vmatpush1.msra.mxu0 0.0
        %1227 = vmatprep.subr.mxu0 0.0
        %1228 = vmatpush1.msra.mxu0 0.0
        %1229 = vmatprep.subr.mxu0 0.0
        %1230 = vmatpush1.msra.mxu0 0.0
        %1231 = vmatprep.subr.mxu0 0.0
        %1232 = vmatpush1.msra.mxu0 0.0
        %1233 = vmatprep.subr.mxu0 0.0
        %1234 = vmatpush1.msra.mxu0 0.0
        %1235 = vmatprep.subr.mxu0 0.0
        %1236 = vmatpush1.msra.mxu0 0.0
        %1237 = vmatprep.subr.mxu0 0.0
        %1238 = vmatpush1.msra.mxu0 0.0
        %1239 = vmatprep.subr.mxu0 0.0
        %1240 = vmatpush1.msra.mxu0 0.0
        %1241 = vmatprep.subr.mxu0 0.0
        %1242 = vmatpush1.msra.mxu0 0.0
        %1243 = vmatprep.mubr.f32.mxu0 0.0
        %1244 = vmatmul.mubr.f32.gmra.mrb[0].mxu0 %v1106
        %v1245 = vpop.f32.mrb[0].mxu0
        %v1246 = vadd.f32 0.0, %v1245
        %v1247 = vpop.f32.mrb[0].mxu0
        %v1248 = vadd.f32 0.0, %v1247
        %1249 = vdwg.mxu0
        %1250 = vmatprep.subr.mxu0 %v1038
        %1251 = vmatpush1.msra.mxu0 %v1037
        %1252 = vmatprep.subr.mxu0 %v1046
        %1253 = vmatpush1.msra.mxu0 %v1045
        %1254 = vmatprep.subr.mxu0 %v1054
        %1255 = vmatpush1.msra.mxu0 %v1053
        %1256 = vmatprep.subr.mxu0 %v1062
        %1257 = vmatpush1.msra.mxu0 %v1061
        %1258 = vmatprep.subr.mxu0 %v1070
        %1259 = vmatpush1.msra.mxu0 %v1069
        %1260 = vmatprep.subr.mxu0 %v1078
        %1261 = vmatpush1.msra.mxu0 %v1077
        %1262 = vmatprep.subr.mxu0 %v1086
        %1263 = vmatpush1.msra.mxu0 %v1085
        %1264 = vmatprep.subr.mxu0 %v1094
        %1265 = vmatpush1.msra.mxu0 %v1093
        %1266 = vmatprep.subr.mxu0 %v1102
        %1267 = vmatpush1.msra.mxu0 %v1101
        %1268 = vmatprep.subr.mxu0 0.0
        %1269 = vmatpush1.msra.mxu0 0.0
        %1270 = vmatprep.subr.mxu0 0.0
        %1271 = vmatpush1.msra.mxu0 0.0
        %1272 = vmatprep.subr.mxu0 0.0
        %1273 = vmatpush1.msra.mxu0 0.0
        %1274 = vmatprep.subr.mxu0 0.0
        %1275 = vmatpush1.msra.mxu0 0.0
        %1276 = vmatprep.subr.mxu0 0.0
        %1277 = vmatpush1.msra.mxu0 0.0
        %1278 = vmatprep.subr.mxu0 0.0
        %1279 = vmatpush1.msra.mxu0 0.0
        %1280 = vmatprep.subr.mxu0 0.0
        %1281 = vmatpush1.msra.mxu0 0.0
        %1282 = vmatprep.subr.mxu0 0.0
        %1283 = vmatpush1.msra.mxu0 0.0
        %1284 = vmatprep.subr.mxu0 0.0
        %1285 = vmatpush1.msra.mxu0 0.0
        %1286 = vmatprep.subr.mxu0 0.0
        %1287 = vmatpush1.msra.mxu0 0.0
        %1288 = vmatprep.subr.mxu0 0.0
        %1289 = vmatpush1.msra.mxu0 0.0
        %1290 = vmatprep.subr.mxu0 0.0
        %1291 = vmatpush1.msra.mxu0 0.0
        %1292 = vmatprep.subr.mxu0 0.0
        %1293 = vmatpush1.msra.mxu0 0.0
        %1294 = vmatprep.subr.mxu0 0.0
        %1295 = vmatpush1.msra.mxu0 0.0
        %1296 = vmatprep.subr.mxu0 0.0
        %1297 = vmatpush1.msra.mxu0 0.0
        %1298 = vmatprep.subr.mxu0 0.0
        %1299 = vmatpush1.msra.mxu0 0.0
        %1300 = vmatprep.subr.mxu0 0.0
        %1301 = vmatpush1.msra.mxu0 0.0
        %1302 = vmatprep.subr.mxu0 0.0
        %1303 = vmatpush1.msra.mxu0 0.0
        %1304 = vmatprep.subr.mxu0 0.0
        %1305 = vmatpush1.msra.mxu0 0.0
        %1306 = vmatprep.subr.mxu0 0.0
        %1307 = vmatpush1.msra.mxu0 0.0
        %1308 = vmatprep.subr.mxu0 0.0
        %1309 = vmatpush1.msra.mxu0 0.0
        %1310 = vmatprep.subr.mxu0 0.0
        %1311 = vmatpush1.msra.mxu0 0.0
        %1312 = vmatprep.subr.mxu0 0.0
        %1313 = vmatpush1.msra.mxu0 0.0
        %1314 = vmatprep.mubr.f32.mxu0 0.0
        %1315 = vmatmul.mubr.f32.gmra.mrb[0].mxu0 %v1106
        %v1316 = vpop.f32.mrb[0].mxu0
        %v1317 = vadd.f32 0.0, %v1316
        %v1318 = vpop.f32.mrb[0].mxu0
        %v1319 = vadd.f32 0.0, %v1318
        %1320 = vdwg.mxu0
        %1321 = vmatprep.subr.mxu0 %v1040
        %1322 = vmatpush1.msra.mxu0 %v1039
        %1323 = vmatprep.subr.mxu0 %v1048
        %1324 = vmatpush1.msra.mxu0 %v1047
        %1325 = vmatprep.subr.mxu0 %v1056
        %1326 = vmatpush1.msra.mxu0 %v1055
        %1327 = vmatprep.subr.mxu0 %v1064
        %1328 = vmatpush1.msra.mxu0 %v1063
        %1329 = vmatprep.subr.mxu0 %v1072
        %1330 = vmatpush1.msra.mxu0 %v1071
        %1331 = vmatprep.subr.mxu0 %v1080
        %1332 = vmatpush1.msra.mxu0 %v1079
        %1333 = vmatprep.subr.mxu0 %v1088
        %1334 = vmatpush1.msra.mxu0 %v1087
        %1335 = vmatprep.subr.mxu0 %v1096
        %1336 = vmatpush1.msra.mxu0 %v1095
        %1337 = vmatprep.subr.mxu0 %v1104
        %1338 = vmatpush1.msra.mxu0 %v1103
        %1339 = vmatprep.subr.mxu0 0.0
        %1340 = vmatpush1.msra.mxu0 0.0
        %1341 = vmatprep.subr.mxu0 0.0
        %1342 = vmatpush1.msra.mxu0 0.0
        %1343 = vmatprep.subr.mxu0 0.0
        %1344 = vmatpush1.msra.mxu0 0.0
        %1345 = vmatprep.subr.mxu0 0.0
        %1346 = vmatpush1.msra.mxu0 0.0
        %1347 = vmatprep.subr.mxu0 0.0
        %1348 = vmatpush1.msra.mxu0 0.0
        %1349 = vmatprep.subr.mxu0 0.0
        %1350 = vmatpush1.msra.mxu0 0.0
        %1351 = vmatprep.subr.mxu0 0.0
        %1352 = vmatpush1.msra.mxu0 0.0
        %1353 = vmatprep.subr.mxu0 0.0
        %1354 = vmatpush1.msra.mxu0 0.0
        %1355 = vmatprep.subr.mxu0 0.0
        %1356 = vmatpush1.msra.mxu0 0.0
        %1357 = vmatprep.subr.mxu0 0.0
        %1358 = vmatpush1.msra.mxu0 0.0
        %1359 = vmatprep.subr.mxu0 0.0
        %1360 = vmatpush1.msra.mxu0 0.0
        %1361 = vmatprep.subr.mxu0 0.0
        %1362 = vmatpush1.msra.mxu0 0.0
        %1363 = vmatprep.subr.mxu0 0.0
        %1364 = vmatpush1.msra.mxu0 0.0
        %1365 = vmatprep.subr.mxu0 0.0
        %1366 = vmatpush1.msra.mxu0 0.0
        %1367 = vmatprep.subr.mxu0 0.0
        %1368 = vmatpush1.msra.mxu0 0.0
        %1369 = vmatprep.subr.mxu0 0.0
        %1370 = vmatpush1.msra.mxu0 0.0
        %1371 = vmatprep.subr.mxu0 0.0
        %1372 = vmatpush1.msra.mxu0 0.0
        %1373 = vmatprep.subr.mxu0 0.0
        %1374 = vmatpush1.msra.mxu0 0.0
        %1375 = vmatprep.subr.mxu0 0.0
        %1376 = vmatpush1.msra.mxu0 0.0
        %1377 = vmatprep.subr.mxu0 0.0
        %1378 = vmatpush1.msra.mxu0 0.0
        %1379 = vmatprep.subr.mxu0 0.0
        %1380 = vmatpush1.msra.mxu0 0.0
        %1381 = vmatprep.subr.mxu0 0.0
        %1382 = vmatpush1.msra.mxu0 0.0
        %1383 = vmatprep.subr.mxu0 0.0
        %1384 = vmatpush1.msra.mxu0 0.0
        %1385 = vmatprep.mubr.f32.mxu0 0.0
        %1386 = vmatmul.mubr.f32.gmra.mrb[0].mxu0 %v1106
        %v1387 = vpop.f32.mrb[0].mxu0
        %v1388 = vadd.f32 0.0, %v1387
        %v1389 = vpop.f32.mrb[0].mxu0
        %v1390 = vadd.f32 0.0, %v1389
        %1391 = vdwg.mxu0
        %1392 = vst [vmem:[%s215] sm:$0xff] %v1175
        %1393 = vst [vmem:[%s215 + $0x8] sm:$0xff] %v1177
        %1394 = vst [vmem:[%s215 + $0x10] sm:$0xff] %v1246
        %1395 = vst [vmem:[%s215 + $0x18] sm:$0xff] %v1248
        %1396 = vst [vmem:[%s215 + $0x20] sm:$0xff] %v1317
        %1397 = vst [vmem:[%s215 + $0x28] sm:$0xff] %v1319
        %1398 = vst [vmem:[%s215 + $0x30] sm:$0xff] %v1388
        %1399 = vst [vmem:[%s215 + $0x38] sm:$0xff] %v1390
        %s1400 = sand.u32 %s118, 1
        %s1401 = scalar_lea.sflag [#allocation4], %s1400
        %s1402 = sand.u32 %s118, 1
        %s1403 = smul.addr %s1402, 64
        %s1404 = scalar_lea.vmem [#allocation3], %s1403
        // Predicated region
        $region33: #{sinc_conv_forward.1} parent=31 // pred_check
          %p1405 = pneg %p128
        $region34: #{sinc_conv_forward.1} parent=31 // pred_check_branch
          %1407 = sbr.rel (%p1405) target = $region36
        $region35: #{sinc_conv_forward.1} parent=31 // pred_region
          %s1408 = smul.u32 8, %s22
          %s1410 = ssub.s32 1024, 1024
          %1411 = vsyncadd %s1401, %s1410
          %s1412 = smul.addr %s21, 8
          %s1413 = sadd.s32 %s1408, %s1412
          %s1414 = smul.addr %s1413, 128
          %s1415 = scalar_lea.hbm %s3, %s1414
          %s1417 = sshll.u32 %s1404, 4
          %s1418 = int_to_ptr.vmem [resolvable:$true] %s1417
          %1420 = dma.vmem_to_hbm [thread:$0]  %s1418, 1024, %s1415, %s1401
        $region36: #{sinc_conv_forward.1} parent=31 // pred_fallthru
          _
      $region32: #{sinc_conv_forward.1} parent=5 // pred_fallthru
        _
      %p1421 = scmp.le.s32.totalorder 2, %s12
      // Predicated region
      $region37: #{sinc_conv_forward.1} parent=5 // pred_check
        %p1422 = pneg %p1421
      $region38: #{sinc_conv_forward.1} parent=5 // pred_check_branch
        %1424 = sbr.rel (%p1422) target = $region40
      $region39: #{sinc_conv_forward.1} parent=5 // pred_region
        %s1425 = ssub.s32 %s12, 2
        // Predicated region
        $region41: #{sinc_conv_forward.1} parent=39 // pred_check
          %p1426 = pneg %p134
        $region42: #{sinc_conv_forward.1} parent=39 // pred_check_branch
          %1428 = sbr.rel (%p1426) target = $region44
        $region43: #{sinc_conv_forward.1} parent=39 // pred_region
          %s1429 = sand.u32 %s119, 1
          %s1430 = scalar_lea.sflag [#allocation4], %s1429
          %s1431 = sand.u32 %s119, 1
          %s1432 = smul.addr %s1431, 64
          %s1433 = scalar_lea.vmem [#allocation3], %s1432
          %1434 = dma.done %s1430, 1024
        $region44: #{sinc_conv_forward.1} parent=39 // pred_fallthru
          _
      $region40: #{sinc_conv_forward.1} parent=5 // pred_fallthru
        _
    $region6: #{sinc_conv_forward.1} parent=1 // loop_footer
      %s16 = sadd.s32 1, %s12
    $region7: #{sinc_conv_forward.1} parent=1 // loop_footer_branch
      %11 = sbr.rel target = $region3
    $region8: #{sinc_conv_forward.1} parent=1 // loop_exit
      _
    %1435 = vsyncpa [#allocation4], 1
    %s1436 = scalar_lea.sflag [#allocation4], 1
    %1437 = vsyncpa %s1436, 1

</llo_original>
